<compile_context>
chip_gen: v5e
topology: v5e:2x2
jax: 0.10.0
libtpu: 0.0.40
codegen_flags: <defaults>
</compile_context>

<pallas_src>
import functools

import jax
import jax.numpy as jnp
from jax import lax
from jax.experimental import pallas as pl
from jax.experimental.pallas import tpu as pltpu

LANE = 128
SUB = 8
TILE_ROWS_MAX = 2048      # (2048, 128) f32 block = 1 MiB per input per buffer
NUM_PARTS = 2             # leading "parallel" axis: 2 TCs on v7x, no-op on v5e/v6e


def _iou_partial_kernel(x_ref, y_ref, inter_ref, total_ref, *,
                        apply_sigmoid: bool,
                        rows: int,
                        tile_rows: int,
                        steps_per_part: int,
                        need_mask: bool):
    s = pl.program_id(1)

    @pl.when(s == 0)
    def _init():
        inter_ref[...] = jnp.zeros_like(inter_ref)
        total_ref[...] = jnp.zeros_like(total_ref)

    x = x_ref[...]
    y = y_ref[...].astype(jnp.float32)

    if apply_sigmoid:
        # (sigmoid(x) > 0.5) == (x > 0) exactly (strict compare, sigmoid(0)=0.5).
        # Keeps the work on the VPU, off the single EUP slot.
        x = (x > 0).astype(jnp.float32)
    else:
        x = x.astype(jnp.float32)

    if need_mask:
        # Ragged last block / phantom blocks of a partition are masked to zero.
        # (The index_map clamps the DMA so it stays in bounds; the data there
        # may be garbage, hence mask *before* any arithmetic.)
        p = pl.program_id(0)
        start = (p * steps_per_part + s) * tile_rows
        row_ids = lax.broadcasted_iota(jnp.int32, (tile_rows, LANE), 0) + start
        valid = row_ids < rows
        x = jnp.where(valid, x, 0.0)
        y = jnp.where(valid, y, 0.0)

    groups = tile_rows // SUB
    # Reduce only over whole (8,128) vreg tiles: pure elementwise VPU adds.
    # The single cross-lane reduction happens in the wrapper on the tiny
    # (NUM_PARTS*8, 128) partial arrays.
    inter_ref[...] += (x * y).reshape(groups, SUB, LANE).sum(axis=0)
    total_ref[...] += (x + y).reshape(groups, SUB, LANE).sum(axis=0)


def iou_loss(inputs: jax.Array, targets: jax.Array,
             smooth: float = 1e-6, sigmoid: bool = True) -> jax.Array:
    """IoU score for binary segmentation masks (matches IoULoss.forward)."""
    assert inputs.shape == targets.shape, \
        "Sizes from the inputs & targets must be equal."
    assert inputs.ndim == 4, \
        "The inputs must be a 4D tensor (BATCHES, CHANNELS, H, W)."

    x = inputs.reshape(-1)            # free reshape (contiguous)
    y = targets.reshape(-1)
    n = x.shape[0]

    # Zero padding is exact for both paths (0 > 0 is False; 0 adds 0 to both
    # sums).  Only materialized in the uncommon ragged case.
    pad = (-n) % (SUB * LANE)
    if pad:
        # TODO(synk): handle the ragged tail with a manual masked DMA instead
        # of a full-tensor pad copy when n % 1024 != 0.
        x = jnp.pad(x, (0, pad))
        y = jnp.pad(y, (0, pad))

    rows = (n + pad) // LANE          # multiple of 8
    x2 = x.reshape(rows, LANE)        # free reshape
    y2 = y.reshape(rows, LANE)

    tile_rows = min(TILE_ROWS_MAX, rows)          # both multiples of 8
    s_total = pl.cdiv(rows, tile_rows)            # total row-tiles
    steps_per_part = pl.cdiv(s_total, NUM_PARTS)  # reduction steps per partition
    covered_rows = NUM_PARTS * steps_per_part * tile_rows
    need_mask = covered_rows != rows

    def in_index_map(pidx, sidx):
        blk = pidx * steps_per_part + sidx
        if need_mask:
            blk = jnp.minimum(blk, s_total - 1)   # keep the DMA in bounds
        return (blk, 0)

    kernel = functools.partial(
        _iou_partial_kernel,
        apply_sigmoid=bool(sigmoid),
        rows=rows,
        tile_rows=tile_rows,
        steps_per_part=steps_per_part,
        need_mask=need_mask,
    )

    bytes_accessed = int(
        rows * LANE * (x2.dtype.itemsize + y2.dtype.itemsize)
        + 2 * NUM_PARTS * SUB * LANE * 4)

    inter_p, total_p = pl.pallas_call(
        kernel,
        out_shape=(
            jax.ShapeDtypeStruct((NUM_PARTS * SUB, LANE), jnp.float32),
            jax.ShapeDtypeStruct((NUM_PARTS * SUB, LANE), jnp.float32),
        ),
        grid_spec=pltpu.PrefetchScalarGridSpec(
            num_scalar_prefetch=0,
            grid=(NUM_PARTS, steps_per_part),
            in_specs=[
                pl.BlockSpec((tile_rows, LANE), in_index_map),
                pl.BlockSpec((tile_rows, LANE), in_index_map),
            ],
            out_specs=[
                pl.BlockSpec((SUB, LANE), lambda pidx, sidx: (pidx, 0)),
                pl.BlockSpec((SUB, LANE), lambda pidx, sidx: (pidx, 0)),
            ],
        ),
        compiler_params=pltpu.CompilerParams(
            dimension_semantics=("parallel", "arbitrary"),
        ),
        cost_estimate=pl.CostEstimate(
            flops=4 * n, transcendentals=0, bytes_accessed=bytes_accessed),
    )(x2, y2)

    # Single cross-lane reduction + smooth division on the tiny partials.
    intersection = jnp.sum(inter_p)
    total = jnp.sum(total_p)
    union = total - intersection
    smooth = jnp.float32(smooth)
    return (intersection + smooth) / (union + smooth)


def _iou_loss_ref(inputs, targets, smooth=1e-6, sigmoid=True):
    """Pure-JAX reference mirroring the PyTorch forward."""
    x = inputs
    if sigmoid:
        x = (jax.nn.sigmoid(x) > 0.5).astype(jnp.float32)
    x = x.reshape(-1).astype(jnp.float32)
    t = targets.reshape(-1).astype(jnp.float32)
    intersection = jnp.sum(x * t)
    total = jnp.sum(x + t)
    union = total - intersection
    return (intersection + smooth) / (union + smooth)


if __name__ == "__main__":
    key = jax.random.PRNGKey(0)
    k1, k2, k3, k4 = jax.random.split(key, 4)

    # Primary small test (matches the module's expected 4-D NCHW layout).
    B, C, H, W = 2, 4, 16, 16
    inputs = jax.random.normal(k1, (B, C, H, W), dtype=jnp.float32)   # logits
    targets = (jax.random.uniform(k2, (B, C, H, W)) > 0.5).astype(jnp.float32)

    loss = jax.block_until_ready(iou_loss(inputs, targets, smooth=1e-6, sigmoid=True))
    ref = _iou_loss_ref(inputs, targets, smooth=1e-6, sigmoid=True)
    assert jnp.allclose(loss, ref, rtol=1e-5, atol=1e-6), (loss, ref)

    # No-sigmoid path.
    loss2 = jax.block_until_ready(iou_loss(targets, targets, sigmoid=False))
    ref2 = _iou_loss_ref(targets, targets, sigmoid=False)
    assert jnp.allclose(loss2, ref2, rtol=1e-5, atol=1e-6), (loss2, ref2)

    # Multi-tile case: exercises both partitions with a real reduction step each.
    x3 = jax.random.normal(k3, (2, 4, 256, 256), dtype=jnp.float32)
    t3 = (jax.random.uniform(k4, (2, 4, 256, 256)) > 0.5).astype(jnp.float32)
    loss3 = jax.block_until_ready(iou_loss(x3, t3))
    ref3 = _iou_loss_ref(x3, t3)
    assert jnp.allclose(loss3, ref3, rtol=1e-5, atol=1e-6), (loss3, ref3)

    # Ragged case: exercises the pad fallback + in-kernel masking.
    x4 = jax.random.normal(k3, (1, 3, 50, 47), dtype=jnp.float32)
    t4 = (jax.random.uniform(k4, (1, 3, 50, 47)) > 0.5).astype(jnp.float32)
    loss4 = jax.block_until_ready(iou_loss(x4, t4))
    ref4 = _iou_loss_ref(x4, t4)
    assert jnp.allclose(loss4, ref4, rtol=1e-5, atol=1e-6), (loss4, ref4)

    print("KERNEL_OK")
</pallas_src>

<mosaic_0001>
module attributes {stable_mosaic.version = 11 : i64} {
  func.func @_iou_partial_kernel(%arg0: i32, %arg1: i32, %arg2: memref<16x128xf32, #tpu.memory_space<vmem>>, %arg3: memref<16x128xf32, #tpu.memory_space<vmem>>, %arg4: memref<8x128xf32, #tpu.memory_space<vmem>>, %arg5: memref<8x128xf32, #tpu.memory_space<vmem>>) attributes {dimension_semantics = [#tpu.dimension_semantics<parallel>, #tpu.dimension_semantics<arbitrary>], iteration_bounds = array<i64: 2, 1>, scalar_prefetch = 0 : i64, scratch_operands = 0 : i64, tpu.core_type = #tpu.core_type<tc>, window_params = [{transform_indices = @transform_0, window_bounds = array<i64: 16, 128>}, {transform_indices = @transform_1, window_bounds = array<i64: 16, 128>}, {transform_indices = @transform_2, window_bounds = array<i64: 8, 128>}, {transform_indices = @transform_3, window_bounds = array<i64: 8, 128>}]} {
    %c0_i32 = arith.constant 0 : i32
    %0 = arith.cmpi eq, %arg1, %c0_i32 : i32
    %1 = arith.extui %0 : i1 to i32
    %c0_i32_0 = arith.constant 0 : i32
    %2 = arith.cmpi ne, %1, %c0_i32_0 : i32
    scf.if %2 {
      %cst_17 = arith.constant 0.000000e+00 : f32
      %33 = vector.broadcast %cst_17 : f32 to vector<8x128xf32>
      %c0_18 = arith.constant 0 : index
      %c0_19 = arith.constant 0 : index
      %34 = vector.load %arg4[%c0_18, %c0_19] : memref<8x128xf32, #tpu.memory_space<vmem>>, vector<8x128xf32>
      tpu.vector_store %arg4[%c0_18, %c0_19], %33 {strides = array<i32>} : memref<8x128xf32, #tpu.memory_space<vmem>>, vector<8x128xf32>,
      %cst_20 = arith.constant 0.000000e+00 : f32
      %35 = vector.broadcast %cst_20 : f32 to vector<8x128xf32>
      %c0_21 = arith.constant 0 : index
      %c0_22 = arith.constant 0 : index
      %36 = vector.load %arg5[%c0_21, %c0_22] : memref<8x128xf32, #tpu.memory_space<vmem>>, vector<8x128xf32>
      tpu.vector_store %arg5[%c0_21, %c0_22], %35 {strides = array<i32>} : memref<8x128xf32, #tpu.memory_space<vmem>>, vector<8x128xf32>,
    } else {
    }
    %c0 = arith.constant 0 : index
    %c0_1 = arith.constant 0 : index
    %3 = vector.load %arg2[%c0, %c0_1] : memref<16x128xf32, #tpu.memory_space<vmem>>, vector<16x128xf32>
    %c0_2 = arith.constant 0 : index
    %c0_3 = arith.constant 0 : index
    %4 = vector.load %arg3[%c0_2, %c0_3] : memref<16x128xf32, #tpu.memory_space<vmem>>, vector<16x128xf32>
    %cst = arith.constant 0.000000e+00 : f32
    %5 = vector.broadcast %cst : f32 to vector<16x128xf32>
    %6 = arith.cmpf ogt, %3, %5 : vector<16x128xf32>
    %7 = arith.extui %6 : vector<16x128xi1> to vector<16x128xi32>
    %8 = arith.sitofp %7 : vector<16x128xi32> to vector<16x128xf32>
    %c1_i32 = arith.constant 1 : i32
    %9 = arith.muli %arg0, %c1_i32 : i32
    %10 = arith.addi %9, %arg1 : i32
    %c16_i32 = arith.constant 16 : i32
    %11 = arith.muli %10, %c16_i32 : i32
    %12 = tpu.iota {dimensions = array<i32: 0>} : vector<16x128xi32>
    %13 = vector.broadcast %11 : i32 to vector<16x128xi32>
    %14 = arith.addi %12, %13 : vector<16x128xi32>
    %c16_i32_4 = arith.constant 16 : i32
    %15 = vector.broadcast %c16_i32_4 : i32 to vector<16x128xi32>
    %16 = arith.cmpi slt, %14, %15 : vector<16x128xi32>
    %cst_5 = arith.constant 0.000000e+00 : f32
    %17 = vector.broadcast %cst_5 : f32 to vector<16x128xf32>
    %18 = arith.select %16, %8, %17 : vector<16x128xi1>, vector<16x128xf32>
    %cst_6 = arith.constant 0.000000e+00 : f32
    %19 = vector.broadcast %cst_6 : f32 to vector<16x128xf32>
    %20 = arith.select %16, %4, %19 : vector<16x128xi1>, vector<16x128xf32>
    %c0_7 = arith.constant 0 : index
    %c0_8 = arith.constant 0 : index
    %21 = vector.load %arg4[%c0_7, %c0_8] : memref<8x128xf32, #tpu.memory_space<vmem>>, vector<8x128xf32>
    %22 = arith.mulf %18, %20 : vector<16x128xf32>
    %23 = vector.shape_cast %22 : vector<16x128xf32> to vector<2x8x128xf32>
    %cst_9 = arith.constant dense<0.000000e+00> : vector<8x128xf32>
    %24 = vector.multi_reduction <add>, %23, %cst_9 [0] : vector<2x8x128xf32> to vector<8x128xf32>
    %25 = arith.addf %21, %24 : vector<8x128xf32>
    %c0_10 = arith.constant 0 : index
    %c0_11 = arith.constant 0 : index
    %26 = vector.load %arg4[%c0_10, %c0_11] : memref<8x128xf32, #tpu.memory_space<vmem>>, vector<8x128xf32>
    tpu.vector_store %arg4[%c0_10, %c0_11], %25 {strides = array<i32>} : memref<8x128xf32, #tpu.memory_space<vmem>>, vector<8x128xf32>,
    %c0_12 = arith.constant 0 : index
    %c0_13 = arith.constant 0 : index
    %27 = vector.load %arg5[%c0_12, %c0_13] : memref<8x128xf32, #tpu.memory_space<vmem>>, vector<8x128xf32>
    %28 = arith.addf %18, %20 : vector<16x128xf32>
    %29 = vector.shape_cast %28 : vector<16x128xf32> to vector<2x8x128xf32>
    %cst_14 = arith.constant dense<0.000000e+00> : vector<8x128xf32>
    %30 = vector.multi_reduction <add>, %29, %cst_14 [0] : vector<2x8x128xf32> to vector<8x128xf32>
    %31 = arith.addf %27, %30 : vector<8x128xf32>
    %c0_15 = arith.constant 0 : index
    %c0_16 = arith.constant 0 : index
    %32 = vector.load %arg5[%c0_15, %c0_16] : memref<8x128xf32, #tpu.memory_space<vmem>>, vector<8x128xf32>
    tpu.vector_store %arg5[%c0_15, %c0_16], %31 {strides = array<i32>} : memref<8x128xf32, #tpu.memory_space<vmem>>, vector<8x128xf32>,
    return
  }
  func.func @transform_0(%arg0: i32, %arg1: i32) -> (i32, i32) {
    %c1_i32 = arith.constant 1 : i32
    %0 = arith.muli %arg0, %c1_i32 : i32
    %1 = arith.addi %0, %arg1 : i32
    %c0_i32 = arith.constant 0 : i32
    %2 = arith.minsi %1, %c0_i32 : i32
    %c0_i32_0 = arith.constant 0 : i32
    %c0_i32_1 = arith.constant 0 : i32
    return %2, %c0_i32_0 : i32, i32
  }
  func.func @transform_1(%arg0: i32, %arg1: i32) -> (i32, i32) {
    %c1_i32 = arith.constant 1 : i32
    %0 = arith.muli %arg0, %c1_i32 : i32
    %1 = arith.addi %0, %arg1 : i32
    %c0_i32 = arith.constant 0 : i32
    %2 = arith.minsi %1, %c0_i32 : i32
    %c0_i32_0 = arith.constant 0 : i32
    %c0_i32_1 = arith.constant 0 : i32
    return %2, %c0_i32_0 : i32, i32
  }
  func.func @transform_2(%arg0: i32, %arg1: i32) -> (i32, i32) {
    %c0_i32 = arith.constant 0 : i32
    %c0_i32_0 = arith.constant 0 : i32
    return %arg0, %c0_i32 : i32, i32
  }
  func.func @transform_3(%arg0: i32, %arg1: i32) -> (i32, i32) {
    %c0_i32 = arith.constant 0 : i32
    %c0_i32_0 = arith.constant 0 : i32
    return %arg0, %c0_i32 : i32, i32
  }
}

</mosaic_0001>

<llo_original>
// kernel: tpu_custom_call.1
$region0: #{tpu_custom_call.1}
  #allocation0 [shape = 'u32[]', space=smem, size = 0x4, offset = 0x4, fixed_abs, tag = 'smem constant byte address 0x4 - core index']
  #allocation1 [shape = 'u32[72,128]{1,0:T(1,128)}', space=vmem, size = 0x9000, scoped, tag = 'internal scratch']
  %s0 = inlined_call_operand.hbm [shape: f32[16,128], index: 0, kind: input, shape index: {}]
  %s1 = inlined_call_operand.hbm [shape: f32[16,128], index: 1, kind: input, shape index: {}]
  %s2 = inlined_call_operand.hbm [shape: f32[16,128], index: 2, kind: output, shape index: {0}]
  %s3 = inlined_call_operand.hbm [shape: f32[16,128], index: 3, kind: output, shape index: {1}]
  %4 = xla_tuple %s2, %s3
  %s5 = sld [smem:[#allocation0]]
  $region61: #{tpu_custom_call.1} parent=0
    _
  %s7 = ssub.s32 1, %s5
  %s8 = scalar_select 0, %s7, %s5
  $region1: #{tpu_custom_call.1} parent=0
    #allocation2 [shape = 'u8[16384]{0}', space=vmem, size = 0x4000, scoped, tag = 'input window, operand 0']
    #allocation3 [shape = 's32[2]{0}', space=sflag, size = 0x8, scoped, tag = 'scoped memory for tpu_custom_call.1']
    #allocation4 [shape = 's32[2]{0}', space=sflag, size = 0x8, scoped, tag = 'scoped memory for tpu_custom_call.1']
    #allocation5 [shape = 'u8[16384]{0}', space=vmem, size = 0x4000, scoped, tag = 'input window, operand 1']
    #allocation6 [shape = 's32[2]{0}', space=sflag, size = 0x8, scoped, tag = 'scoped memory for tpu_custom_call.1']
    #allocation7 [shape = 'u8[8192]{0}', space=vmem, size = 0x2000, scoped, tag = 'output window, operand 0']
    #allocation8 [shape = 'u8[8192]{0}', space=vmem, size = 0x2000, scoped, tag = 'output window, operand 1']
    #allocation9 [shape = 's32[2]{0}', space=sflag, size = 0x8, scoped, tag = 'scoped memory for tpu_custom_call.1']
    %9 = vsyncpa [#allocation3], 0
    %s10 = scalar_lea.sflag [#allocation3], 1
    %11 = vsyncpa %s10, 0
    %12 = vsyncpa [#allocation6], 0
    %s13 = scalar_lea.sflag [#allocation6], 1
    %14 = vsyncpa %s13, 0
    %15 = vsyncpa [#allocation4], 0
    %s16 = scalar_lea.sflag [#allocation4], 1
    %17 = vsyncpa %s16, 0
    %18 = vsyncpa [#allocation9], 0
    %s19 = scalar_lea.sflag [#allocation9], 1
    %20 = vsyncpa %s19, 0
    loop: start=0, step=1, limit=4
    $region2: #{tpu_custom_call.1} parent=1 // loop_pre_header
      _
    $region3: #{tpu_custom_call.1} parent=1 // loop_header
      %s22 = sphi 0, %s26
      %p23 = scmp.ge.s32.totalorder %s22, 4
      %s29 = sphi 0, %s41
      %s30 = sphi 0, %s37
      %s31 = sphi 0, %s29
      %s32 = sphi 0, %s30
      %s33 = sphi 0, %s31
      %s34 = sphi 0, %s32
      %s50 = sphi 0, %s52
      %s53 = sphi 0, %s50
      %s54 = sphi 0, %s53
      %s70 = sphi 0, %s54
      %s82 = sphi 0, %s84
      %s85 = sphi 0, %s82
      %s86 = sphi 0, %s85
      %s102 = sphi 0, %s86
      %s108 = sphi 0, %s110
      %s111 = sphi 0, %s108
      %s112 = sphi 0, %s111
      %s128 = sphi 0, %s112
      %s134 = sphi 0, %s136
      %s137 = sphi 0, %s134
      %s138 = sphi 0, %s137
      %s154 = sphi 0, %s138
    $region4: #{tpu_custom_call.1} parent=1 // loop_header_branch
      %25 = sbr.rel (%p23) target = $region8
    $region5: #{tpu_custom_call.1} parent=1 // loop_body
      %s27 = ssub.s32 %s22, 1
      %s28 = ssub.s32 %s22, 2
      %s35 = sadd.s32 1, %s30
      %p36 = scmp.ge.s32.totalorder %s35, 1
      %s37 = scalar_select %p36, 0, %s35
      %s38 = sadd.s32 1, %s29
      %s39 = scalar_select %p36, %s38, %s29
      %p40 = scmp.ge.s32.totalorder %s39, 2
      %s41 = scalar_select %p40, 0, %s39
      %s42 = sadd.s32 %s29, %s30
      %p43 = scmp.lt.s32.totalorder %s42, 0
      %s44 = scalar_select %p43, %s42, 0
      %s45 = sadd.s32 %s41, %s37
      %p46 = scmp.lt.s32.totalorder %s45, 0
      %s47 = scalar_select %p46, %s45, 0
      %s48 = ssub.s32 %s44, %s47
      %p49 = scmp.eq.s32.totalorder %s48, 0
      %s51 = sadd.s32 %s50, 1
      %s52 = scalar_select %p49, %s50, %s51
      %p55 = pneg %p49
      %p56 = scmp.eq.s32.totalorder %s22, 1
      %p57 = por %p55, %p56
      %p58 = scmp.ne.s32.totalorder %s50, %s53
      %p59 = scmp.eq.s32.totalorder %s22, 0
      %p60 = por %p58, %p59
      %p61 = scmp.ne.s32.totalorder %s50, %s53
      %p62 = scmp.eq.s32.totalorder %s27, 1
      %p63 = por %p61, %p62
      %p64 = scmp.ne.s32.totalorder %s53, %s54
      %p65 = scmp.eq.s32.totalorder %s27, 0
      %p66 = por %p64, %p65
      %p67 = scmp.ne.s32.totalorder %s53, %s54
      %p68 = scmp.eq.s32.totalorder %s28, 1
      %p69 = por %p67, %p68
      %p71 = scmp.ne.s32.totalorder %s54, %s70
      %p72 = scmp.eq.s32.totalorder %s28, 0
      %p73 = por %p71, %p72
      %s74 = sadd.s32 %s29, %s30
      %p75 = scmp.lt.s32.totalorder %s74, 0
      %s76 = scalar_select %p75, %s74, 0
      %s77 = sadd.s32 %s41, %s37
      %p78 = scmp.lt.s32.totalorder %s77, 0
      %s79 = scalar_select %p78, %s77, 0
      %s80 = ssub.s32 %s76, %s79
      %p81 = scmp.eq.s32.totalorder %s80, 0
      %s83 = sadd.s32 %s82, 1
      %s84 = scalar_select %p81, %s82, %s83
      %p87 = pneg %p81
      %p88 = scmp.eq.s32.totalorder %s22, 1
      %p89 = por %p87, %p88
      %p90 = scmp.ne.s32.totalorder %s82, %s85
      %p91 = scmp.eq.s32.totalorder %s22, 0
      %p92 = por %p90, %p91
      %p93 = scmp.ne.s32.totalorder %s82, %s85
      %p94 = scmp.eq.s32.totalorder %s27, 1
      %p95 = por %p93, %p94
      %p96 = scmp.ne.s32.totalorder %s85, %s86
      %p97 = scmp.eq.s32.totalorder %s27, 0
      %p98 = por %p96, %p97
      %p99 = scmp.ne.s32.totalorder %s85, %s86
      %p100 = scmp.eq.s32.totalorder %s28, 1
      %p101 = por %p99, %p100
      %p103 = scmp.ne.s32.totalorder %s86, %s102
      %p104 = scmp.eq.s32.totalorder %s28, 0
      %p105 = por %p103, %p104
      %s106 = ssub.s32 %s29, %s41
      %p107 = scmp.eq.s32.totalorder %s106, 0
      %s109 = sadd.s32 %s108, 1
      %s110 = scalar_select %p107, %s108, %s109
      %p113 = pneg %p107
      %p114 = scmp.eq.s32.totalorder %s22, 1
      %p115 = por %p113, %p114
      %p116 = scmp.ne.s32.totalorder %s108, %s111
      %p117 = scmp.eq.s32.totalorder %s22, 0
      %p118 = por %p116, %p117
      %p119 = scmp.ne.s32.totalorder %s108, %s111
      %p120 = scmp.eq.s32.totalorder %s27, 1
      %p121 = por %p119, %p120
      %p122 = scmp.ne.s32.totalorder %s111, %s112
      %p123 = scmp.eq.s32.totalorder %s27, 0
      %p124 = por %p122, %p123
      %p125 = scmp.ne.s32.totalorder %s111, %s112
      %p126 = scmp.eq.s32.totalorder %s28, 1
      %p127 = por %p125, %p126
      %p129 = scmp.ne.s32.totalorder %s112, %s128
      %p130 = scmp.eq.s32.totalorder %s28, 0
      %p131 = por %p129, %p130
      %s132 = ssub.s32 %s29, %s41
      %p133 = scmp.eq.s32.totalorder %s132, 0
      %s135 = sadd.s32 %s134, 1
      %s136 = scalar_select %p133, %s134, %s135
      %p139 = pneg %p133
      %p140 = scmp.eq.s32.totalorder %s22, 1
      %p141 = por %p139, %p140
      %p142 = scmp.ne.s32.totalorder %s134, %s137
      %p143 = scmp.eq.s32.totalorder %s22, 0
      %p144 = por %p142, %p143
      %p145 = scmp.ne.s32.totalorder %s134, %s137
      %p146 = scmp.eq.s32.totalorder %s27, 1
      %p147 = por %p145, %p146
      %p148 = scmp.ne.s32.totalorder %s137, %s138
      %p149 = scmp.eq.s32.totalorder %s27, 0
      %p150 = por %p148, %p149
      %p151 = scmp.ne.s32.totalorder %s137, %s138
      %p152 = scmp.eq.s32.totalorder %s28, 1
      %p153 = por %p151, %p152
      %p155 = scmp.ne.s32.totalorder %s138, %s154
      %p156 = scmp.eq.s32.totalorder %s28, 0
      %p157 = por %p155, %p156
      %p158 = scmp.le.s32.totalorder 1, %s22
      %p159 = scmp.lt.s32.totalorder %s22, 3
      %p160 = pnand %p158, %p159
      %p161 = pneg %p160
      // Predicated region
      $region9: #{tpu_custom_call.1} parent=5 // pred_check
        _
      $region10: #{tpu_custom_call.1} parent=5 // pred_check_branch
        %163 = sbr.rel (%p160) target = $region12
      $region11: #{tpu_custom_call.1} parent=5 // pred_region
        %s164 = ssub.s32 %s22, 1
      $region12: #{tpu_custom_call.1} parent=5 // pred_fallthru
        _
      %p165 = scmp.lt.s32.totalorder %s22, 2
      // Predicated region
      $region13: #{tpu_custom_call.1} parent=5 // pred_check
        %p166 = pneg %p165
      $region14: #{tpu_custom_call.1} parent=5 // pred_check_branch
        %168 = sbr.rel (%p166) target = $region16
      $region15: #{tpu_custom_call.1} parent=5 // pred_region
        // Predicated region
        $region17: #{tpu_custom_call.1} parent=15 // pred_check
          %p169 = pneg %p60
        $region18: #{tpu_custom_call.1} parent=15 // pred_check_branch
          %171 = sbr.rel (%p169) target = $region20
        $region19: #{tpu_custom_call.1} parent=15 // pred_region
          %s172 = sand.u32 %s50, 1
          %s173 = scalar_lea.sflag [#allocation3], %s172
          %s174 = sand.u32 %s50, 1
          %s175 = smul.addr %s174, 16
          %s176 = scalar_lea.vmem [#allocation2], %s175
          %s177 = sadd.s32 %s29, %s30
          %p178 = scmp.lt.s32.totalorder %s177, 0
          %s179 = scalar_select %p178, %s177, 0
          %s180 = smul.u32 2, %s179
          %182 = vsyncadd %s173, 0
          %s183 = smul.addr %s180, 8
          %s184 = scalar_lea.hbm %s0, %s183
          %s185 = sshll.u32 %s184, 4
          %s186 = int_to_ptr.hbm [resolvable:$true] %s185
          %s187 = sshll.u32 %s176, 4
          %s188 = int_to_ptr.vmem [resolvable:$true] %s187
          %193 = dma.hbm_to_vmem [thread:$0]  %s186, 256, %s188, %s173, 128, 128, 8
        $region20: #{tpu_custom_call.1} parent=15 // pred_fallthru
          _
        // Predicated region
        $region21: #{tpu_custom_call.1} parent=15 // pred_check
          %p194 = pneg %p92
        $region22: #{tpu_custom_call.1} parent=15 // pred_check_branch
          %196 = sbr.rel (%p194) target = $region24
        $region23: #{tpu_custom_call.1} parent=15 // pred_region
          %s197 = sand.u32 %s82, 1
          %s198 = scalar_lea.sflag [#allocation6], %s197
          %s199 = sand.u32 %s82, 1
          %s200 = smul.addr %s199, 16
          %s201 = scalar_lea.vmem [#allocation5], %s200
          %s202 = sadd.s32 %s29, %s30
          %p203 = scmp.lt.s32.totalorder %s202, 0
          %s204 = scalar_select %p203, %s202, 0
          %s205 = smul.u32 2, %s204
          %207 = vsyncadd %s198, 0
          %s208 = smul.addr %s205, 8
          %s209 = scalar_lea.hbm %s1, %s208
          %s210 = sshll.u32 %s209, 4
          %s211 = int_to_ptr.hbm [resolvable:$true] %s210
          %s212 = sshll.u32 %s201, 4
          %s213 = int_to_ptr.vmem [resolvable:$true] %s212
          %218 = dma.hbm_to_vmem [thread:$0]  %s211, 256, %s213, %s198, 128, 128, 8
        $region24: #{tpu_custom_call.1} parent=15 // pred_fallthru
          _
      $region16: #{tpu_custom_call.1} parent=5 // pred_fallthru
        _
      %p219 = scmp.le.s32.totalorder 1, %s22
      %p220 = scmp.lt.s32.totalorder %s22, 3
      %p221 = pnand %p219, %p220
      %p222 = pneg %p221
      // Predicated region
      $region25: #{tpu_custom_call.1} parent=5 // pred_check
        _
      $region26: #{tpu_custom_call.1} parent=5 // pred_check_branch
        %224 = sbr.rel (%p221) target = $region28
      $region27: #{tpu_custom_call.1} parent=5 // pred_region
        %s225 = ssub.s32 %s22, 1
        %s226 = sand.u32 %s53, 1
        %s227 = scalar_lea.sflag [#allocation3], %s226
        %s228 = sand.u32 %s53, 1
        %s229 = smul.addr %s228, 16
        %s230 = scalar_lea.vmem [#allocation2], %s229
        // Predicated region
        $region29: #{tpu_custom_call.1} parent=27 // pred_check
          %p231 = pneg %p66
        $region30: #{tpu_custom_call.1} parent=27 // pred_check_branch
          %233 = sbr.rel (%p231) target = $region32
        $region31: #{tpu_custom_call.1} parent=27 // pred_region
          %235 = dma.done %s227, 256
        $region32: #{tpu_custom_call.1} parent=27 // pred_fallthru
          _
        %s236 = sand.u32 %s85, 1
        %s237 = scalar_lea.sflag [#allocation6], %s236
        %s238 = sand.u32 %s85, 1
        %s239 = smul.addr %s238, 16
        %s240 = scalar_lea.vmem [#allocation5], %s239
        // Predicated region
        $region33: #{tpu_custom_call.1} parent=27 // pred_check
          %p241 = pneg %p98
        $region34: #{tpu_custom_call.1} parent=27 // pred_check_branch
          %243 = sbr.rel (%p241) target = $region36
        $region35: #{tpu_custom_call.1} parent=27 // pred_region
          %245 = dma.done %s237, 256
        $region36: #{tpu_custom_call.1} parent=27 // pred_fallthru
          _
        %s246 = sand.u32 %s53, 1
        %s247 = scalar_lea.sflag [#allocation3], %s246
        %s248 = sand.u32 %s53, 1
        %s249 = smul.addr %s248, 16
        %s250 = scalar_lea.vmem [#allocation2], %s249
        %p251 = pneg %p66
        %p252 = pneg %p63
        %s253 = sand.u32 %s85, 1
        %s254 = scalar_lea.sflag [#allocation6], %s253
        %s255 = sand.u32 %s85, 1
        %s256 = smul.addr %s255, 16
        %s257 = scalar_lea.vmem [#allocation5], %s256
        %p258 = pneg %p98
        %p259 = pneg %p95
        %p260 = pneg %p124
        %p261 = pneg %p121
        %s262 = sand.u32 %s111, 1
        %s263 = scalar_lea.sflag [#allocation4], %s262
        %s264 = sand.u32 %s111, 1
        %s265 = smul.addr %s264, 8
        %s266 = scalar_lea.vmem [#allocation7], %s265
        %p267 = pneg %p150
        %p268 = pneg %p147
        %s269 = sand.u32 %s137, 1
        %s270 = scalar_lea.sflag [#allocation9], %s269
        %s271 = sand.u32 %s137, 1
        %s272 = smul.addr %s271, 8
        %s273 = scalar_lea.vmem [#allocation8], %s272
        %s274 = sadd.s32 %s31, %s32
        %p275 = scmp.lt.s32.totalorder %s274, 0
        %s276 = scalar_select %p275, %s274, 0
        %s277 = smul.u32 2, %s276
        %s278 = sadd.s32 %s31, %s32
        %p279 = scmp.lt.s32.totalorder %s278, 0
        %s280 = scalar_select %p279, %s278, 0
        %s281 = smul.u32 2, %s280
        %p282 = scmp.eq.s32.totalorder %s32, 0
        // Predicated region
        $region37: #{tpu_custom_call.1} parent=27 // pred_check
          %p283 = pneg %p282
        $region38: #{tpu_custom_call.1} parent=27 // pred_check_branch
          %285 = sbr.rel (%p283) target = $region40
        $region39: #{tpu_custom_call.1} parent=27 // pred_region
          %286 = vst [vmem:[%s266] sm:$0xff] 0.0
          %287 = vst [vmem:[%s273] sm:$0xff] 0.0
        $region40: #{tpu_custom_call.1} parent=27 // pred_fallthru
          _
        %v288 = vld [vmem:[%s230] sm:$0xff]
        %v289 = vld [vmem:[%s230 + $0x8] sm:$0xff]
        %v290 = vld [vmem:[%s240] sm:$0xff]
        %v291 = vld [vmem:[%s240 + $0x8] sm:$0xff]
        %vm292 = vcmp.gt.f32.partialorder %v288, 0.0
        %vm293 = vcmp.gt.f32.partialorder %v289, 0.0
        %v294 = vsel %vm292, 1, 0
        %v295 = vsel %vm293, 1, 0
        %v296 = vcvt.s32.f32 %v294
        %v297 = vcvt.s32.f32 %v295
        %s298 = sadd.s32 %s31, %s32
        %s299 = smul.u32 %s298, 16
        %v300 = vlaneseq
        %v301 = vshrl.u32 %v300, 7
        %v302 = vadd.s32 %v301, 8
        %v303 = vstv %s299
        %v304 = vadd.s32 %v301, %v303
        %v305 = vadd.s32 %v302, %v303
        %vm306 = vcmp.lt.s32.totalorder %v304, 16
        %vm307 = vcmp.lt.s32.totalorder %v305, 16
        %v308 = vsel %vm306, %v296, 0.0
        %v309 = vsel %vm307, %v297, 0.0
        %v310 = vsel %vm306, %v290, 0.0
        %v311 = vsel %vm307, %v291, 0.0
        %v312 = vld [vmem:[%s266] sm:$0xff]
        %v313 = vmul.f32 %v308, %v310
        %v314 = vmul.f32 %v309, %v311
        %v315 = vadd.f32 %v313, %v314
        %v316 = vadd.f32 %v312, %v315
        %317 = vst [vmem:[%s266] sm:$0xff] %v316
        %v318 = vld [vmem:[%s273] sm:$0xff]
        %v319 = vadd.f32 %v308, %v310
        %v320 = vadd.f32 %v309, %v311
        %v321 = vadd.f32 %v319, %v320
        %v322 = vadd.f32 %v318, %v321
        %323 = vst [vmem:[%s273] sm:$0xff] %v322
        %s324 = sand.u32 %s111, 1
        %s325 = scalar_lea.sflag [#allocation4], %s324
        %s326 = sand.u32 %s111, 1
        %s327 = smul.addr %s326, 8
        %s328 = scalar_lea.vmem [#allocation7], %s327
        %s329 = sand.u32 %s137, 1
        %s330 = scalar_lea.sflag [#allocation9], %s329
        %s331 = sand.u32 %s137, 1
        %s332 = smul.addr %s331, 8
        %s333 = scalar_lea.vmem [#allocation8], %s332
        // Predicated region
        $region41: #{tpu_custom_call.1} parent=27 // pred_check
          %p334 = pneg %p121
        $region42: #{tpu_custom_call.1} parent=27 // pred_check_branch
          %336 = sbr.rel (%p334) target = $region44
        $region43: #{tpu_custom_call.1} parent=27 // pred_region
          %338 = vsyncadd %s325, 0
          %s339 = smul.addr %s31, 8
          %s340 = scalar_lea.hbm %s2, %s339
          %s342 = sshll.u32 %s328, 4
          %s343 = int_to_ptr.vmem [resolvable:$true] %s342
          %s344 = sshll.u32 %s340, 4
          %s345 = int_to_ptr.hbm [resolvable:$true] %s344
          %347 = dma.vmem_to_hbm [thread:$0]  %s343, 128, %s345, %s325
        $region44: #{tpu_custom_call.1} parent=27 // pred_fallthru
          _
        // Predicated region
        $region45: #{tpu_custom_call.1} parent=27 // pred_check
          %p348 = pneg %p147
        $region46: #{tpu_custom_call.1} parent=27 // pred_check_branch
          %350 = sbr.rel (%p348) target = $region48
        $region47: #{tpu_custom_call.1} parent=27 // pred_region
          %352 = vsyncadd %s330, 0
          %s353 = smul.addr %s31, 8
          %s354 = scalar_lea.hbm %s3, %s353
          %s356 = sshll.u32 %s333, 4
          %s357 = int_to_ptr.vmem [resolvable:$true] %s356
          %s358 = sshll.u32 %s354, 4
          %s359 = int_to_ptr.hbm [resolvable:$true] %s358
          %361 = dma.vmem_to_hbm [thread:$0]  %s357, 128, %s359, %s330
        $region48: #{tpu_custom_call.1} parent=27 // pred_fallthru
          _
      $region28: #{tpu_custom_call.1} parent=5 // pred_fallthru
        _
      %p362 = scmp.le.s32.totalorder 2, %s22
      // Predicated region
      $region49: #{tpu_custom_call.1} parent=5 // pred_check
        %p363 = pneg %p362
      $region50: #{tpu_custom_call.1} parent=5 // pred_check_branch
        %365 = sbr.rel (%p363) target = $region52
      $region51: #{tpu_custom_call.1} parent=5 // pred_region
        %s366 = ssub.s32 %s22, 2
        // Predicated region
        $region53: #{tpu_custom_call.1} parent=51 // pred_check
          %p367 = pneg %p127
        $region54: #{tpu_custom_call.1} parent=51 // pred_check_branch
          %369 = sbr.rel (%p367) target = $region56
        $region55: #{tpu_custom_call.1} parent=51 // pred_region
          %s370 = sand.u32 %s112, 1
          %s371 = scalar_lea.sflag [#allocation4], %s370
          %s372 = sand.u32 %s112, 1
          %s373 = smul.addr %s372, 8
          %s374 = scalar_lea.vmem [#allocation7], %s373
          %376 = dma.done %s371, 128
        $region56: #{tpu_custom_call.1} parent=51 // pred_fallthru
          _
        // Predicated region
        $region57: #{tpu_custom_call.1} parent=51 // pred_check
          %p377 = pneg %p153
        $region58: #{tpu_custom_call.1} parent=51 // pred_check_branch
          %379 = sbr.rel (%p377) target = $region60
        $region59: #{tpu_custom_call.1} parent=51 // pred_region
          %s380 = sand.u32 %s138, 1
          %s381 = scalar_lea.sflag [#allocation9], %s380
          %s382 = sand.u32 %s138, 1
          %s383 = smul.addr %s382, 8
          %s384 = scalar_lea.vmem [#allocation8], %s383
          %386 = dma.done %s381, 128
        $region60: #{tpu_custom_call.1} parent=51 // pred_fallthru
          _
      $region52: #{tpu_custom_call.1} parent=5 // pred_fallthru
        _
    $region6: #{tpu_custom_call.1} parent=1 // loop_footer
      %s26 = sadd.s32 1, %s22
    $region7: #{tpu_custom_call.1} parent=1 // loop_footer_branch
      %21 = sbr.rel target = $region3
    $region8: #{tpu_custom_call.1} parent=1 // loop_exit
      _
    %387 = vsyncpa [#allocation3], 1
    %s388 = scalar_lea.sflag [#allocation3], 1
    %389 = vsyncpa %s388, 1
    %390 = vsyncpa [#allocation6], 1
    %s391 = scalar_lea.sflag [#allocation6], 1
    %392 = vsyncpa %s391, 1
    %393 = vsyncpa [#allocation4], 1
    %s394 = scalar_lea.sflag [#allocation4], 1
    %395 = vsyncpa %s394, 1
    %396 = vsyncpa [#allocation9], 1
    %s397 = scalar_lea.sflag [#allocation9], 1
    %398 = vsyncpa %s397, 1

</llo_original>
